<compile_context>
chip_gen: v5e
topology: v5e:2x2
jax: 0.10.0
libtpu: 0.0.40
codegen_flags: <defaults>
</compile_context>

<pallas_src>
import functools
import math

import jax
import jax.numpy as jnp
import numpy as np
from jax.experimental import pallas as pl
from jax.experimental.pallas import tpu as pltpu


def _channel_attention_kernel(x_ref, w1_ref, w2_ref, o_ref, sum_ref, max_ref,
                              *, hw, thw, needs_mask):
    k = pl.program_id(1)
    last = pl.num_programs(1) - 1

    @pl.when(k == 0)
    def _init():
        sum_ref[...] = jnp.zeros_like(sum_ref)
        max_ref[...] = jnp.full_like(max_ref, -jnp.inf)

    # (C, THW) spatial tile of the current batch row; accumulate in f32.
    x = x_ref[0].astype(jnp.float32)

    def _accumulate(x_sum, x_max):
        sum_ref[...] += jnp.sum(x_sum, axis=-1, keepdims=True)            # (C, 1)
        max_ref[...] = jnp.maximum(max_ref[...],
                                   jnp.max(x_max, axis=-1, keepdims=True))

    if needs_mask:
        # Mask only the final (partial) tile -> no VPU mask work on the hot path.
        @pl.when(k < last)
        def _full_tiles():
            _accumulate(x, x)

        @pl.when(k == last)
        def _tail_tile():
            lane = jax.lax.broadcasted_iota(jnp.int32, (1, thw), 1)
            valid = (k * thw + lane) < hw                  # (1, THW), broadcasts
            _accumulate(jnp.where(valid, x, 0.0), jnp.where(valid, x, -jnp.inf))
    else:
        _accumulate(x, x)

    @pl.when(k == last)
    def _finalize():
        avg = sum_ref[...] * (1.0 / hw)                                   # (C, 1)
        mx = max_ref[...]                                                 # (C, 1)

        # Fuse the avg / max branches: pooled = [avg | max] as (C, 2).
        col = jax.lax.broadcasted_iota(jnp.int32, (avg.shape[0], 2), 1)
        pooled = jnp.where(col == 0, avg, mx)                             # (C, 2)

        # fc2(relu(fc1(pooled))) for both columns at once (1x1 convs == matmuls).
        h = jnp.maximum(
            jnp.dot(w1_ref[...], pooled,
                    preferred_element_type=jnp.float32), 0.0)             # (hid, 2)
        out2 = jnp.dot(w2_ref[...], h,
                       preferred_element_type=jnp.float32)                # (C, 2)
        out = jnp.sum(out2, axis=-1, keepdims=True)                       # (C, 1)

        o_ref[0] = jax.nn.sigmoid(out).astype(o_ref.dtype)


def _pick_thw(C, hw, itemsize, target_block_bytes):
    """Spatial tile size.

    * If the whole (C, HW) row fits the block budget, use the full extent
      (exempt from the 128-lane divisibility rule, no mask, no tail step).
    * Otherwise pick the largest 128-multiple that fits the budget.
    """
    if C * hw * itemsize <= target_block_bytes:
        return hw
    max_lanes = max(128, target_block_bytes // max(C * itemsize, 1))
    thw = max(128, (min(hw, max_lanes) // 128) * 128)
    if thw >= hw:
        return hw
    return thw


def channel_attention(x, w1, w2, *, thw=None, target_block_bytes=4 * 1024 * 1024):
    """x: (B, C, H, W) float; w1: (hidden, C); w2: (C, hidden).

    Returns sigmoid channel-attention weights of shape (B, C, 1, 1), dtype of x.
    bf16 x is supported (kernel accumulates in f32) and halves HBM traffic.
    On v7x, pass target_block_bytes=8<<20 for better per-step amortisation.
    """
    B, C, H, W = x.shape
    hidden = w1.shape[0]
    hw = H * W
    xf = x.reshape(B, C, hw)

    if thw is None:
        thw = _pick_thw(C, hw, x.dtype.itemsize, target_block_bytes)
    assert thw == hw or thw % 128 == 0, "thw must be a multiple of 128 or == H*W"
    k_steps = pl.cdiv(hw, thw)
    needs_mask = (hw % thw) != 0

    kernel = functools.partial(_channel_attention_kernel,
                               hw=hw, thw=thw, needs_mask=needs_mask)

    # Advisory cost: ~2 ops/elem pooling + tiny fused matmuls; bytes ~= one pass
    # over x plus weights and the (B, C) output.
    flops = 2 * B * C * hw + B * (4 * hidden * C * 2) + 4 * B * C
    bytes_accessed = (xf.size * xf.dtype.itemsize
                      + w1.size * w1.dtype.itemsize
                      + w2.size * w2.dtype.itemsize
                      + B * C * x.dtype.itemsize)

    # VMEM budget: double-buffered x tile + (tiny) weights + scratch + output,
    # with headroom; never below the smallest scoped default (16 MiB on v5e).
    block_bytes = C * thw * x.dtype.itemsize
    weight_bytes = (w1.size * w1.dtype.itemsize + w2.size * w2.dtype.itemsize)
    vmem_limit = max(16 * 1024 * 1024,
                     2 * block_bytes + 2 * weight_bytes + 8 * C + 2 * 1024 * 1024)

    out = pl.pallas_call(
        kernel,
        out_shape=jax.ShapeDtypeStruct((B, C, 1), x.dtype),
        grid_spec=pltpu.PrefetchScalarGridSpec(
            num_scalar_prefetch=0,
            grid=(B, k_steps),
            in_specs=[
                pl.BlockSpec((1, C, thw), lambda b, k: (b, 0, k)),
                pl.BlockSpec((hidden, C), lambda b, k: (0, 0)),
                pl.BlockSpec((C, hidden), lambda b, k: (0, 0)),
            ],
            out_specs=pl.BlockSpec((1, C, 1), lambda b, k: (b, 0, 0)),
            scratch_shapes=[
                pltpu.VMEM((C, 1), jnp.float32),   # running sum
                pltpu.VMEM((C, 1), jnp.float32),   # running max
            ],
        ),
        compiler_params=pltpu.CompilerParams(
            dimension_semantics=("parallel", "arbitrary"),
            vmem_limit_bytes=int(vmem_limit)),
        cost_estimate=pl.CostEstimate(
            flops=int(flops),
            transcendentals=int(B * C),
            bytes_accessed=int(bytes_accessed)),
    )(xf, w1, w2)
    return out.reshape(B, C, 1, 1)


def reference(x, w1, w2):
    """Pure-JAX reference of the PyTorch forward (for the correctness check)."""
    xf = x.astype(jnp.float32)
    avg = jnp.mean(xf, axis=(2, 3))                   # (B, C)
    mx = jnp.max(xf, axis=(2, 3))                     # (B, C)

    def branch(p):
        h = jnp.maximum(p @ w1.T, 0.0)                # (B, hidden)
        return h @ w2.T                               # (B, C)

    out = branch(avg) + branch(mx)
    return jax.nn.sigmoid(out)[:, :, None, None]      # (B, C, 1, 1)


if __name__ == "__main__":
    # in_planes must be >= 16 so that in_planes // 16 >= 1 (as in the module).
    B, C, H, W = 2, 32, 32, 32
    hidden = C // 16

    key = jax.random.PRNGKey(0)
    kx, k1, k2 = jax.random.split(key, 3)

    x = jax.random.normal(kx, (B, C, H, W), dtype=jnp.float32)

    # Deterministic kaiming_normal_(mode='fan_out') for 1x1 convs:
    # std = sqrt(2 / (out_channels * kH * kW)) = sqrt(2 / out_channels).
    w1 = jax.random.normal(k1, (hidden, C), dtype=jnp.float32) * math.sqrt(2.0 / hidden)
    w2 = jax.random.normal(k2, (C, hidden), dtype=jnp.float32) * math.sqrt(2.0 / C)

    ref = jax.block_until_ready(reference(x, w1, w2))

    # 1) Default tile choice: (C, HW) row fits the 4 MiB budget -> full-extent
    #    spatial block, single step, no mask.
    out_default = jax.block_until_ready(channel_attention(x, w1, w2))
    np.testing.assert_allclose(np.asarray(out_default), np.asarray(ref),
                               rtol=1e-5, atol=1e-5)

    # 2) Multi-tile path with a masked partial tail (HW=1024, THW=384 -> 3 steps;
    #    mask only applied on the last step).
    out_tail = jax.block_until_ready(channel_attention(x, w1, w2, thw=384))
    np.testing.assert_allclose(np.asarray(out_tail), np.asarray(ref),
                               rtol=1e-5, atol=1e-5)

    # 3) Multi-tile path with exact division (no mask anywhere): THW=256 -> 4 steps.
    out_even = jax.block_until_ready(channel_attention(x, w1, w2, thw=256))
    np.testing.assert_allclose(np.asarray(out_even), np.asarray(ref),
                               rtol=1e-5, atol=1e-5)

    # 4) bf16 input path (half the HBM traffic; f32 accumulation in-kernel).
    x_bf16 = x.astype(jnp.bfloat16)
    ref_bf16 = jax.block_until_ready(reference(x_bf16, w1, w2))
    out_bf16 = jax.block_until_ready(channel_attention(x_bf16, w1, w2))
    np.testing.assert_allclose(np.asarray(out_bf16, dtype=np.float32),
                               np.asarray(ref_bf16, dtype=np.float32),
                               rtol=2e-2, atol=2e-2)

    print("KERNEL_OK")
</pallas_src>

<mosaic_0001>
module attributes {stable_mosaic.version = 11 : i64} {
  func.func @_channel_attention_kernel(%arg0: i32, %arg1: i32, %arg2: memref<1x32x1024xf32, #tpu.memory_space<vmem>>, %arg3: memref<2x32xf32, #tpu.memory_space<vmem>>, %arg4: memref<32x2xf32, #tpu.memory_space<vmem>>, %arg5: memref<1x32x1xf32, #tpu.memory_space<vmem>>, %arg6: memref<32x1xf32, #tpu.memory_space<vmem>>, %arg7: memref<32x1xf32, #tpu.memory_space<vmem>>) attributes {dimension_semantics = [#tpu.dimension_semantics<parallel>, #tpu.dimension_semantics<arbitrary>], iteration_bounds = array<i64: 2, 1>, scalar_prefetch = 0 : i64, scratch_operands = 2 : i64, tpu.core_type = #tpu.core_type<tc>, window_params = [{transform_indices = @transform_0, window_bounds = array<i64: 1, 32, 1024>}, {pipeline_mode = #tpu.pipeline_mode<synchronous>, transform_indices = @transform_1, window_bounds = array<i64: 2, 32>}, {pipeline_mode = #tpu.pipeline_mode<synchronous>, transform_indices = @transform_2, window_bounds = array<i64: 32, 2>}, {transform_indices = @transform_3, window_bounds = array<i64: 1, 32, 1>}]} {
    %c0_i32 = arith.constant 0 : i32
    %0 = arith.cmpi eq, %arg1, %c0_i32 : i32
    %1 = arith.extui %0 : i1 to i32
    %c0_i32_0 = arith.constant 0 : i32
    %2 = arith.cmpi ne, %1, %c0_i32_0 : i32
    scf.if %2 {
      %cst_14 = arith.constant 0.000000e+00 : f32
      %18 = vector.broadcast %cst_14 : f32 to vector<32x1xf32>
      %c0_15 = arith.constant 0 : index
      %c0_16 = arith.constant 0 : index
      %19 = vector.load %arg6[%c0_15, %c0_16] : memref<32x1xf32, #tpu.memory_space<vmem>>, vector<32x1xf32>
      tpu.vector_store %arg6[%c0_15, %c0_16], %18 {strides = array<i32>} : memref<32x1xf32, #tpu.memory_space<vmem>>, vector<32x1xf32>,
      %cst_17 = arith.constant 0xFF800000 : f32
      %20 = vector.broadcast %cst_17 : f32 to vector<32x1xf32>
      %c0_18 = arith.constant 0 : index
      %c0_19 = arith.constant 0 : index
      %21 = vector.load %arg7[%c0_18, %c0_19] : memref<32x1xf32, #tpu.memory_space<vmem>>, vector<32x1xf32>
      tpu.vector_store %arg7[%c0_18, %c0_19], %20 {strides = array<i32>} : memref<32x1xf32, #tpu.memory_space<vmem>>, vector<32x1xf32>,
    } else {
    }
    %c0 = arith.constant 0 : index
    %c0_1 = arith.constant 0 : index
    %c0_2 = arith.constant 0 : index
    %3 = vector.load %arg2[%c0, %c0_1, %c0_2] : memref<1x32x1024xf32, #tpu.memory_space<vmem>>, vector<1x32x1024xf32>
    %4 = vector.shape_cast %3 : vector<1x32x1024xf32> to vector<32x1024xf32>
    %c0_3 = arith.constant 0 : index
    %c0_4 = arith.constant 0 : index
    %5 = vector.load %arg6[%c0_3, %c0_4] : memref<32x1xf32, #tpu.memory_space<vmem>>, vector<32x1xf32>
    %cst = arith.constant dense<0.000000e+00> : vector<32xf32>
    %6 = vector.multi_reduction <add>, %4, %cst [1] : vector<32x1024xf32> to vector<32xf32>
    %7 = vector.shape_cast %6 : vector<32xf32> to vector<32x1xf32>
    %8 = arith.addf %5, %7 : vector<32x1xf32>
    %c0_5 = arith.constant 0 : index
    %c0_6 = arith.constant 0 : index
    %9 = vector.load %arg6[%c0_5, %c0_6] : memref<32x1xf32, #tpu.memory_space<vmem>>, vector<32x1xf32>
    tpu.vector_store %arg6[%c0_5, %c0_6], %8 {strides = array<i32>} : memref<32x1xf32, #tpu.memory_space<vmem>>, vector<32x1xf32>,
    %c0_7 = arith.constant 0 : index
    %c0_8 = arith.constant 0 : index
    %10 = vector.load %arg7[%c0_7, %c0_8] : memref<32x1xf32, #tpu.memory_space<vmem>>, vector<32x1xf32>
    %cst_9 = arith.constant dense<0xFF800000> : vector<32xf32>
    %11 = vector.multi_reduction <maximumf>, %4, %cst_9 [1] : vector<32x1024xf32> to vector<32xf32>
    %12 = vector.shape_cast %11 : vector<32xf32> to vector<32x1xf32>
    %13 = arith.maximumf %10, %12 : vector<32x1xf32>
    %c0_10 = arith.constant 0 : index
    %c0_11 = arith.constant 0 : index
    %14 = vector.load %arg7[%c0_10, %c0_11] : memref<32x1xf32, #tpu.memory_space<vmem>>, vector<32x1xf32>
    tpu.vector_store %arg7[%c0_10, %c0_11], %13 {strides = array<i32>} : memref<32x1xf32, #tpu.memory_space<vmem>>, vector<32x1xf32>,
    %c0_i32_12 = arith.constant 0 : i32
    %15 = arith.cmpi eq, %arg1, %c0_i32_12 : i32
    %16 = arith.extui %15 : i1 to i32
    %c0_i32_13 = arith.constant 0 : i32
    %17 = arith.cmpi ne, %16, %c0_i32_13 : i32
    scf.if %17 {
      %c0_14 = arith.constant 0 : index
      %c0_15 = arith.constant 0 : index
      %18 = vector.load %arg6[%c0_14, %c0_15] : memref<32x1xf32, #tpu.memory_space<vmem>>, vector<32x1xf32>
      %cst_16 = arith.constant 9.765625E-4 : f32
      %19 = vector.broadcast %cst_16 : f32 to vector<32x1xf32>
      %20 = arith.mulf %18, %19 : vector<32x1xf32>
      %c0_17 = arith.constant 0 : index
      %c0_18 = arith.constant 0 : index
      %21 = vector.load %arg7[%c0_17, %c0_18] : memref<32x1xf32, #tpu.memory_space<vmem>>, vector<32x1xf32>
      %22 = tpu.iota {dimensions = array<i32: 1>} : vector<32x2xi32>
      %c0_i32_19 = arith.constant 0 : i32
      %23 = vector.broadcast %c0_i32_19 : i32 to vector<32x2xi32>
      %24 = arith.cmpi eq, %22, %23 : vector<32x2xi32>
      %25 = vector.shape_cast %20 : vector<32x1xf32> to vector<32x1xf32>
      %26 = vector.broadcast %25 : vector<32x1xf32> to vector<32x2xf32>
      %27 = vector.shape_cast %21 : vector<32x1xf32> to vector<32x1xf32>
      %28 = vector.broadcast %27 : vector<32x1xf32> to vector<32x2xf32>
      %29 = arith.select %24, %26, %28 : vector<32x2xi1>, vector<32x2xf32>
      %c0_20 = arith.constant 0 : index
      %c0_21 = arith.constant 0 : index
      %30 = vector.load %arg3[%c0_20, %c0_21] : memref<2x32xf32, #tpu.memory_space<vmem>>, vector<2x32xf32>
      %cst_22 = arith.constant dense<0.000000e+00> : vector<2x2xf32>
      %31 = tpu.matmul %30, %29, %cst_22 {dimension_numbers = #tpu.dot_dimension_numbers<[1], [0], [0], [1], [0, 0, 1, 1], [], []>} : vector<2x32xf32>, vector<32x2xf32>, vector<2x2xf32> -> vector<2x2xf32>
      %cst_23 = arith.constant 0.000000e+00 : f32
      %32 = vector.broadcast %cst_23 : f32 to vector<2x2xf32>
      %33 = arith.maximumf %31, %32 : vector<2x2xf32>
      %c0_24 = arith.constant 0 : index
      %c0_25 = arith.constant 0 : index
      %34 = vector.load %arg4[%c0_24, %c0_25] : memref<32x2xf32, #tpu.memory_space<vmem>>, vector<32x2xf32>
      %cst_26 = arith.constant dense<0.000000e+00> : vector<32x2xf32>
      %35 = tpu.matmul %34, %33, %cst_26 {dimension_numbers = #tpu.dot_dimension_numbers<[1], [0], [0], [1], [0, 0, 1, 1], [], []>} : vector<32x2xf32>, vector<2x2xf32>, vector<32x2xf32> -> vector<32x2xf32>
      %cst_27 = arith.constant dense<0.000000e+00> : vector<32xf32>
      %36 = vector.multi_reduction <add>, %35, %cst_27 [1] : vector<32x2xf32> to vector<32xf32>
      %37 = vector.shape_cast %36 : vector<32xf32> to vector<32x1xf32>
      %38 = arith.negf %37 : vector<32x1xf32>
      %39 = math.exp %38 : vector<32x1xf32>
      %cst_28 = arith.constant 1.000000e+00 : f32
      %40 = vector.broadcast %cst_28 : f32 to vector<32x1xf32>
      %41 = arith.addf %40, %39 : vector<32x1xf32>
      %42 = arith.divf %40, %41 : vector<32x1xf32>
      %c0_29 = arith.constant 0 : index
      %c0_30 = arith.constant 0 : index
      %c0_31 = arith.constant 0 : index
      %43 = vector.load %arg5[%c0_29, %c0_30, %c0_31] : memref<1x32x1xf32, #tpu.memory_space<vmem>>, vector<1x32x1xf32>
      %44 = vector.shape_cast %43 : vector<1x32x1xf32> to vector<32x1xf32>
      %45 = vector.shape_cast %42 : vector<32x1xf32> to vector<1x32x1xf32>
      tpu.vector_store %arg5[%c0_29, %c0_30, %c0_31], %45 {strides = array<i32>} : memref<1x32x1xf32, #tpu.memory_space<vmem>>, vector<1x32x1xf32>,
    } else {
    }
    return
  }
  func.func @transform_0(%arg0: i32, %arg1: i32) -> (i32, i32, i32) {
    %c0_i32 = arith.constant 0 : i32
    %c0_i32_0 = arith.constant 0 : i32
    return %arg0, %c0_i32, %arg1 : i32, i32, i32
  }
  func.func @transform_1(%arg0: i32, %arg1: i32) -> (i32, i32) {
    %c0_i32 = arith.constant 0 : i32
    %c0_i32_0 = arith.constant 0 : i32
    %c0_i32_1 = arith.constant 0 : i32
    return %c0_i32, %c0_i32_0 : i32, i32
  }
  func.func @transform_2(%arg0: i32, %arg1: i32) -> (i32, i32) {
    %c0_i32 = arith.constant 0 : i32
    %c0_i32_0 = arith.constant 0 : i32
    %c0_i32_1 = arith.constant 0 : i32
    return %c0_i32, %c0_i32_0 : i32, i32
  }
  func.func @transform_3(%arg0: i32, %arg1: i32) -> (i32, i32, i32) {
    %c0_i32 = arith.constant 0 : i32
    %c0_i32_0 = arith.constant 0 : i32
    %c0_i32_1 = arith.constant 0 : i32
    return %arg0, %c0_i32, %c0_i32_0 : i32, i32, i32
  }
}

</mosaic_0001>

<llo_original>
// kernel: tpu_custom_call.1
$region0: #{tpu_custom_call.1}
  #allocation0 [shape = 'u32[]', space=smem, size = 0x4, offset = 0x4, fixed_abs, tag = 'smem constant byte address 0x4 - core index']
  #allocation1 [shape = 'u32[72,128]{1,0:T(1,128)}', space=vmem, size = 0x9000, scoped, tag = 'internal scratch']
  #allocation2 [shape = 'f32[32,1]{1,0:T(8,128)}', space=vmem, size = 0x4000, scoped, tag = 'scratch operand']
  #allocation3 [shape = 'f32[32,1]{1,0:T(8,128)}', space=vmem, size = 0x4000, scoped, tag = 'scratch operand']
  %s0 = inlined_call_operand.hbm [shape: f32[2,32,1024], index: 0, kind: input, shape index: {}]
  %s1 = inlined_call_operand.vmem [shape: f32[2,32], index: 1, kind: input, shape index: {}]
  %s2 = inlined_call_operand.vmem [shape: f32[32,2], index: 2, kind: input, shape index: {}]
  %s3 = inlined_call_operand.vmem [shape: f32[2,32,1], index: 3, kind: output, shape index: {}]
  %s4 = sld [smem:[#allocation0]]
  $region57: #{tpu_custom_call.1} parent=0
    _
  %s6 = ssub.s32 1, %s4
  %s7 = scalar_select 0, %s6, %s4
  $region1: #{tpu_custom_call.1} parent=0
    #allocation4 [shape = 'u8[262144]{0}', space=vmem, size = 0x40000, scoped, tag = 'input window, operand 0']
    #allocation5 [shape = 's32[2]{0}', space=sflag, size = 0x8, scoped, tag = 'scoped memory for tpu_custom_call.1']
    %8 = vsyncpa [#allocation5], 0
    %s9 = scalar_lea.sflag [#allocation5], 1
    %10 = vsyncpa %s9, 0
    loop: start=0, step=1, limit=4
    $region2: #{tpu_custom_call.1} parent=1 // loop_pre_header
      _
    $region3: #{tpu_custom_call.1} parent=1 // loop_header
      %s12 = sphi 0, %s16
      %p13 = scmp.ge.s32.totalorder %s12, 4
      %s19 = sphi 0, %s31
      %s20 = sphi 0, %s27
      %s21 = sphi 0, %s19
      %s22 = sphi 0, %s20
      %s23 = sphi 0, %s21
      %s24 = sphi 0, %s22
      %s36 = sphi 0, %s38
      %s39 = sphi 0, %s36
      %s40 = sphi 0, %s39
      %s56 = sphi 0, %s40
      %s60 = sphi 0, %s60
      %s62 = sphi 0, %s60
      %s63 = sphi 0, %s62
      %s77 = sphi 0, %s63
      %s81 = sphi 0, %s81
      %s83 = sphi 0, %s81
      %s84 = sphi 0, %s83
      %s98 = sphi 0, %s84
      %s104 = sphi 0, %s106
      %s107 = sphi 0, %s104
      %s108 = sphi 0, %s107
      %s124 = sphi 0, %s108
    $region4: #{tpu_custom_call.1} parent=1 // loop_header_branch
      %15 = sbr.rel (%p13) target = $region8
    $region5: #{tpu_custom_call.1} parent=1 // loop_body
      %s17 = ssub.s32 %s12, 1
      %s18 = ssub.s32 %s12, 2
      %s25 = sadd.s32 1, %s20
      %p26 = scmp.ge.s32.totalorder %s25, 1
      %s27 = scalar_select %p26, 0, %s25
      %s28 = sadd.s32 1, %s19
      %s29 = scalar_select %p26, %s28, %s19
      %p30 = scmp.ge.s32.totalorder %s29, 2
      %s31 = scalar_select %p30, 0, %s29
      %s32 = ssub.s32 %s19, %s31
      %s33 = ssub.s32 %s20, %s27
      %s34 = sor.u32 %s32, %s33
      %p35 = scmp.eq.s32.totalorder %s34, 0
      %s37 = sadd.s32 %s36, 1
      %s38 = scalar_select %p35, %s36, %s37
      %p41 = pneg %p35
      %p42 = scmp.eq.s32.totalorder %s12, 1
      %p43 = por %p41, %p42
      %p44 = scmp.ne.s32.totalorder %s36, %s39
      %p45 = scmp.eq.s32.totalorder %s12, 0
      %p46 = por %p44, %p45
      %p47 = scmp.ne.s32.totalorder %s36, %s39
      %p48 = scmp.eq.s32.totalorder %s17, 1
      %p49 = por %p47, %p48
      %p50 = scmp.ne.s32.totalorder %s39, %s40
      %p51 = scmp.eq.s32.totalorder %s17, 0
      %p52 = por %p50, %p51
      %p53 = scmp.ne.s32.totalorder %s39, %s40
      %p54 = scmp.eq.s32.totalorder %s18, 1
      %p55 = por %p53, %p54
      %p57 = scmp.ne.s32.totalorder %s40, %s56
      %p58 = scmp.eq.s32.totalorder %s18, 0
      %p59 = por %p57, %p58
      %s61 = sadd.s32 %s60, 1
      %p64 = scmp.eq.s32.totalorder %s12, 1
      %p65 = scmp.ne.s32.totalorder %s60, %s62
      %p66 = scmp.eq.s32.totalorder %s12, 0
      %p67 = por %p65, %p66
      %p68 = scmp.ne.s32.totalorder %s60, %s62
      %p69 = scmp.eq.s32.totalorder %s17, 1
      %p70 = por %p68, %p69
      %p71 = scmp.ne.s32.totalorder %s62, %s63
      %p72 = scmp.eq.s32.totalorder %s17, 0
      %p73 = por %p71, %p72
      %p74 = scmp.ne.s32.totalorder %s62, %s63
      %p75 = scmp.eq.s32.totalorder %s18, 1
      %p76 = por %p74, %p75
      %p78 = scmp.ne.s32.totalorder %s63, %s77
      %p79 = scmp.eq.s32.totalorder %s18, 0
      %p80 = por %p78, %p79
      %s82 = sadd.s32 %s81, 1
      %p85 = scmp.eq.s32.totalorder %s12, 1
      %p86 = scmp.ne.s32.totalorder %s81, %s83
      %p87 = scmp.eq.s32.totalorder %s12, 0
      %p88 = por %p86, %p87
      %p89 = scmp.ne.s32.totalorder %s81, %s83
      %p90 = scmp.eq.s32.totalorder %s17, 1
      %p91 = por %p89, %p90
      %p92 = scmp.ne.s32.totalorder %s83, %s84
      %p93 = scmp.eq.s32.totalorder %s17, 0
      %p94 = por %p92, %p93
      %p95 = scmp.ne.s32.totalorder %s83, %s84
      %p96 = scmp.eq.s32.totalorder %s18, 1
      %p97 = por %p95, %p96
      %p99 = scmp.ne.s32.totalorder %s84, %s98
      %p100 = scmp.eq.s32.totalorder %s18, 0
      %p101 = por %p99, %p100
      %s102 = ssub.s32 %s19, %s31
      %p103 = scmp.eq.s32.totalorder %s102, 0
      %s105 = sadd.s32 %s104, 1
      %s106 = scalar_select %p103, %s104, %s105
      %p109 = pneg %p103
      %p110 = scmp.eq.s32.totalorder %s12, 1
      %p111 = por %p109, %p110
      %p112 = scmp.ne.s32.totalorder %s104, %s107
      %p113 = scmp.eq.s32.totalorder %s12, 0
      %p114 = por %p112, %p113
      %p115 = scmp.ne.s32.totalorder %s104, %s107
      %p116 = scmp.eq.s32.totalorder %s17, 1
      %p117 = por %p115, %p116
      %p118 = scmp.ne.s32.totalorder %s107, %s108
      %p119 = scmp.eq.s32.totalorder %s17, 0
      %p120 = por %p118, %p119
      %p121 = scmp.ne.s32.totalorder %s107, %s108
      %p122 = scmp.eq.s32.totalorder %s18, 1
      %p123 = por %p121, %p122
      %p125 = scmp.ne.s32.totalorder %s108, %s124
      %p126 = scmp.eq.s32.totalorder %s18, 0
      %p127 = por %p125, %p126
      %p128 = scmp.le.s32.totalorder 1, %s12
      %p129 = scmp.lt.s32.totalorder %s12, 3
      %p130 = pnand %p128, %p129
      %p131 = pneg %p130
      // Predicated region
      $region9: #{tpu_custom_call.1} parent=5 // pred_check
        _
      $region10: #{tpu_custom_call.1} parent=5 // pred_check_branch
        %133 = sbr.rel (%p130) target = $region12
      $region11: #{tpu_custom_call.1} parent=5 // pred_region
        %s134 = ssub.s32 %s12, 1
        // Predicated region
        $region13: #{tpu_custom_call.1} parent=11 // pred_check
          %p135 = pneg %p73
        $region14: #{tpu_custom_call.1} parent=11 // pred_check_branch
          %137 = sbr.rel (%p135) target = $region16
        $region15: #{tpu_custom_call.1} parent=11 // pred_region
          _
        $region16: #{tpu_custom_call.1} parent=11 // pred_fallthru
          _
        // Predicated region
        $region17: #{tpu_custom_call.1} parent=11 // pred_check
          %p138 = pneg %p94
        $region18: #{tpu_custom_call.1} parent=11 // pred_check_branch
          %140 = sbr.rel (%p138) target = $region20
        $region19: #{tpu_custom_call.1} parent=11 // pred_region
          _
        $region20: #{tpu_custom_call.1} parent=11 // pred_fallthru
          _
      $region12: #{tpu_custom_call.1} parent=5 // pred_fallthru
        _
      %p141 = scmp.lt.s32.totalorder %s12, 2
      // Predicated region
      $region21: #{tpu_custom_call.1} parent=5 // pred_check
        %p142 = pneg %p141
      $region22: #{tpu_custom_call.1} parent=5 // pred_check_branch
        %144 = sbr.rel (%p142) target = $region24
      $region23: #{tpu_custom_call.1} parent=5 // pred_region
        // Predicated region
        $region25: #{tpu_custom_call.1} parent=23 // pred_check
          %p145 = pneg %p46
        $region26: #{tpu_custom_call.1} parent=23 // pred_check_branch
          %147 = sbr.rel (%p145) target = $region28
        $region27: #{tpu_custom_call.1} parent=23 // pred_region
          %s148 = sand.u32 %s36, 1
          %s149 = scalar_lea.sflag [#allocation5], %s148
          %s150 = sand.u32 %s36, 1
          %s151 = smul.addr %s150, 256
          %s152 = scalar_lea.vmem [#allocation4], %s151
          %s153 = smul.u32 8, %s20
          %155 = vsyncadd %s149, 0
          %s156 = smul.addr %s19, 32
          %s157 = sadd.s32 %s153, %s156
          %s158 = smul.addr %s157, 8
          %s159 = scalar_lea.hbm %s0, %s158
          %s160 = sshll.u32 %s159, 4
          %s161 = int_to_ptr.hbm [resolvable:$true] %s160
          %s162 = sshll.u32 %s152, 4
          %s163 = int_to_ptr.vmem [resolvable:$true] %s162
          %168 = dma.hbm_to_vmem [thread:$0]  %s161, 4096, %s163, %s149, 1024, 1024, 64
        $region28: #{tpu_custom_call.1} parent=23 // pred_fallthru
          _
      $region24: #{tpu_custom_call.1} parent=5 // pred_fallthru
        _
      %p169 = scmp.le.s32.totalorder 1, %s12
      %p170 = scmp.lt.s32.totalorder %s12, 3
      %p171 = pnand %p169, %p170
      %p172 = pneg %p171
      // Predicated region
      $region29: #{tpu_custom_call.1} parent=5 // pred_check
        _
      $region30: #{tpu_custom_call.1} parent=5 // pred_check_branch
        %174 = sbr.rel (%p171) target = $region32
      $region31: #{tpu_custom_call.1} parent=5 // pred_region
        %s175 = ssub.s32 %s12, 1
        %s176 = sand.u32 %s39, 1
        %s177 = scalar_lea.sflag [#allocation5], %s176
        %s178 = sand.u32 %s39, 1
        %s179 = smul.addr %s178, 256
        %s180 = scalar_lea.vmem [#allocation4], %s179
        // Predicated region
        $region33: #{tpu_custom_call.1} parent=31 // pred_check
          %p181 = pneg %p52
        $region34: #{tpu_custom_call.1} parent=31 // pred_check_branch
          %183 = sbr.rel (%p181) target = $region36
        $region35: #{tpu_custom_call.1} parent=31 // pred_region
          %185 = dma.done %s177, 4096
        $region36: #{tpu_custom_call.1} parent=31 // pred_fallthru
          _
        %s186 = sand.u32 %s39, 1
        %s187 = scalar_lea.sflag [#allocation5], %s186
        %s188 = sand.u32 %s39, 1
        %s189 = smul.addr %s188, 256
        %s190 = scalar_lea.vmem [#allocation4], %s189
        %p191 = pneg %p52
        %p192 = pneg %p49
        %p193 = pneg %p73
        %p194 = pneg %p70
        %p195 = pneg %p94
        %p196 = pneg %p91
        %p197 = pneg %p120
        %p198 = pneg %p117
        %p199 = scmp.lt.s32.totalorder %s21, 1
        %s200 = scalar_select %p199, %s21, 1
        %s201 = smul.addr %s200, 4
        %s202 = smul.addr %s201, 8
        %s203 = scalar_lea.vmem %s3, %s202
        %s204 = smul.u32 8, %s22
        %p205 = scmp.lt.s32.totalorder %s21, 1
        %s206 = scalar_select %p205, %s21, 1
        %s207 = smul.addr %s206, 4
        %s208 = smul.addr %s207, 8
        %s209 = scalar_lea.vmem %s3, %s208
        %p210 = scmp.eq.s32.totalorder %s22, 0
        // Predicated region
        $region37: #{tpu_custom_call.1} parent=31 // pred_check
          %p211 = pneg %p210
        $region38: #{tpu_custom_call.1} parent=31 // pred_check_branch
          %213 = sbr.rel (%p211) target = $region40
        $region39: #{tpu_custom_call.1} parent=31 // pred_region
          %vm214 = vcmask 7168
          %215 = vst.msk [vmem:[#allocation2] sm:$0xff] %vm214, 0.0
          %216 = vst.msk [vmem:[#allocation2 + $0x8] sm:$0xff] %vm214, 0.0
          %217 = vst.msk [vmem:[#allocation2 + $0x10] sm:$0xff] %vm214, 0.0
          %218 = vst.msk [vmem:[#allocation2 + $0x18] sm:$0xff] %vm214, 0.0
          %219 = vst.msk [vmem:[#allocation3] sm:$0xff] %vm214, -inf
          %220 = vst.msk [vmem:[#allocation3 + $0x8] sm:$0xff] %vm214, -inf
          %221 = vst.msk [vmem:[#allocation3 + $0x10] sm:$0xff] %vm214, -inf
          %222 = vst.msk [vmem:[#allocation3 + $0x18] sm:$0xff] %vm214, -inf
        $region40: #{tpu_custom_call.1} parent=31 // pred_fallthru
          _
        %v223 = vld [vmem:[%s180] sm:$0xff]
        %v224 = vld [vmem:[%s180 + $0x8] sm:$0xff]
        %v225 = vld [vmem:[%s180 + $0x10] sm:$0xff]
        %v226 = vld [vmem:[%s180 + $0x18] sm:$0xff]
        %v227 = vld [vmem:[%s180 + $0x20] sm:$0xff]
        %v228 = vld [vmem:[%s180 + $0x28] sm:$0xff]
        %v229 = vld [vmem:[%s180 + $0x30] sm:$0xff]
        %v230 = vld [vmem:[%s180 + $0x38] sm:$0xff]
        %v231 = vld [vmem:[%s180 + $0x40] sm:$0xff]
        %v232 = vld [vmem:[%s180 + $0x48] sm:$0xff]
        %v233 = vld [vmem:[%s180 + $0x50] sm:$0xff]
        %v234 = vld [vmem:[%s180 + $0x58] sm:$0xff]
        %v235 = vld [vmem:[%s180 + $0x60] sm:$0xff]
        %v236 = vld [vmem:[%s180 + $0x68] sm:$0xff]
        %v237 = vld [vmem:[%s180 + $0x70] sm:$0xff]
        %v238 = vld [vmem:[%s180 + $0x78] sm:$0xff]
        %v239 = vld [vmem:[%s180 + $0x80] sm:$0xff]
        %v240 = vld [vmem:[%s180 + $0x88] sm:$0xff]
        %v241 = vld [vmem:[%s180 + $0x90] sm:$0xff]
        %v242 = vld [vmem:[%s180 + $0x98] sm:$0xff]
        %v243 = vld [vmem:[%s180 + $0xa0] sm:$0xff]
        %v244 = vld [vmem:[%s180 + $0xa8] sm:$0xff]
        %v245 = vld [vmem:[%s180 + $0xb0] sm:$0xff]
        %v246 = vld [vmem:[%s180 + $0xb8] sm:$0xff]
        %v247 = vld [vmem:[%s180 + $0xc0] sm:$0xff]
        %v248 = vld [vmem:[%s180 + $0xc8] sm:$0xff]
        %v249 = vld [vmem:[%s180 + $0xd0] sm:$0xff]
        %v250 = vld [vmem:[%s180 + $0xd8] sm:$0xff]
        %v251 = vld [vmem:[%s180 + $0xe0] sm:$0xff]
        %v252 = vld [vmem:[%s180 + $0xe8] sm:$0xff]
        %v253 = vld [vmem:[%s180 + $0xf0] sm:$0xff]
        %v254 = vld [vmem:[%s180 + $0xf8] sm:$0xff]
        %v255 = vld [vmem:[#allocation2] sm:$0xff]
        %v256 = vld [vmem:[#allocation2 + $0x8] sm:$0xff]
        %v257 = vld [vmem:[#allocation2 + $0x10] sm:$0xff]
        %v258 = vld [vmem:[#allocation2 + $0x18] sm:$0xff]
        %v259 = vadd.f32 %v223, %v224
        %v260 = vadd.f32 %v259, %v225
        %v261 = vadd.f32 %v260, %v226
        %v262 = vadd.f32 %v261, %v227
        %v263 = vadd.f32 %v262, %v228
        %v264 = vadd.f32 %v263, %v229
        %v265 = vadd.f32 %v264, %v230
        %266 = vadd.xlane.f32.xlu0 %v265
        %v267 = vpop.xlane.xlu0 %266
        %v268 = vadd.f32 %v231, %v232
        %v269 = vadd.f32 %v268, %v233
        %v270 = vadd.f32 %v269, %v234
        %v271 = vadd.f32 %v270, %v235
        %v272 = vadd.f32 %v271, %v236
        %v273 = vadd.f32 %v272, %v237
        %v274 = vadd.f32 %v273, %v238
        %275 = vadd.xlane.f32.xlu0 %v274
        %v276 = vpop.xlane.xlu0 %275
        %v277 = vadd.f32 %v239, %v240
        %v278 = vadd.f32 %v277, %v241
        %v279 = vadd.f32 %v278, %v242
        %v280 = vadd.f32 %v279, %v243
        %v281 = vadd.f32 %v280, %v244
        %v282 = vadd.f32 %v281, %v245
        %v283 = vadd.f32 %v282, %v246
        %284 = vadd.xlane.f32.xlu0 %v283
        %v285 = vpop.xlane.xlu0 %284
        %v286 = vadd.f32 %v247, %v248
        %v287 = vadd.f32 %v286, %v249
        %v288 = vadd.f32 %v287, %v250
        %v289 = vadd.f32 %v288, %v251
        %v290 = vadd.f32 %v289, %v252
        %v291 = vadd.f32 %v290, %v253
        %v292 = vadd.f32 %v291, %v254
        %293 = vadd.xlane.f32.xlu0 %v292
        %v294 = vpop.xlane.xlu0 %293
        %v295 = vadd.f32 %v255, %v267
        %v296 = vadd.f32 %v256, %v276
        %v297 = vadd.f32 %v257, %v285
        %v298 = vadd.f32 %v258, %v294
        %vm299 = vcmask 7168
        %300 = vst.msk [vmem:[#allocation2] sm:$0xff] %vm299, %v295
        %301 = vst.msk [vmem:[#allocation2 + $0x8] sm:$0xff] %vm299, %v296
        %302 = vst.msk [vmem:[#allocation2 + $0x10] sm:$0xff] %vm299, %v297
        %303 = vst.msk [vmem:[#allocation2 + $0x18] sm:$0xff] %vm299, %v298
        %v304 = vld [vmem:[#allocation3] sm:$0xff]
        %v305 = vld [vmem:[#allocation3 + $0x8] sm:$0xff]
        %v306 = vld [vmem:[#allocation3 + $0x10] sm:$0xff]
        %v307 = vld [vmem:[#allocation3 + $0x18] sm:$0xff]
        %v308 = vmax.f32 %v223, %v224
        %v309 = vmax.f32 %v308, %v225
        %v310 = vmax.f32 %v309, %v226
        %v311 = vmax.f32 %v310, %v227
        %v312 = vmax.f32 %v311, %v228
        %v313 = vmax.f32 %v312, %v229
        %v314 = vmax.f32 %v313, %v230
        %315 = vmax.xlane.f32.xlu0 %v314
        %v316 = vpop.xlane.xlu0 %315
        %v317 = vmax.f32 %v231, %v232
        %v318 = vmax.f32 %v317, %v233
        %v319 = vmax.f32 %v318, %v234
        %v320 = vmax.f32 %v319, %v235
        %v321 = vmax.f32 %v320, %v236
        %v322 = vmax.f32 %v321, %v237
        %v323 = vmax.f32 %v322, %v238
        %324 = vmax.xlane.f32.xlu0 %v323
        %v325 = vpop.xlane.xlu0 %324
        %v326 = vmax.f32 %v239, %v240
        %v327 = vmax.f32 %v326, %v241
        %v328 = vmax.f32 %v327, %v242
        %v329 = vmax.f32 %v328, %v243
        %v330 = vmax.f32 %v329, %v244
        %v331 = vmax.f32 %v330, %v245
        %v332 = vmax.f32 %v331, %v246
        %333 = vmax.xlane.f32.xlu0 %v332
        %v334 = vpop.xlane.xlu0 %333
        %v335 = vmax.f32 %v247, %v248
        %v336 = vmax.f32 %v335, %v249
        %v337 = vmax.f32 %v336, %v250
        %v338 = vmax.f32 %v337, %v251
        %v339 = vmax.f32 %v338, %v252
        %v340 = vmax.f32 %v339, %v253
        %v341 = vmax.f32 %v340, %v254
        %342 = vmax.xlane.f32.xlu0 %v341
        %v343 = vpop.xlane.xlu0 %342
        %v344 = vmax.f32 %v304, %v316
        %v345 = vmax.f32 %v305, %v325
        %v346 = vmax.f32 %v306, %v334
        %v347 = vmax.f32 %v307, %v343
        %348 = vst.msk [vmem:[#allocation3] sm:$0xff] %vm299, %v344
        %349 = vst.msk [vmem:[#allocation3 + $0x8] sm:$0xff] %vm299, %v345
        %350 = vst.msk [vmem:[#allocation3 + $0x10] sm:$0xff] %vm299, %v346
        %351 = vst.msk [vmem:[#allocation3 + $0x18] sm:$0xff] %vm299, %v347
        // Predicated region
        $region41: #{tpu_custom_call.1} parent=31 // pred_check
          %p352 = pneg %p210
        $region42: #{tpu_custom_call.1} parent=31 // pred_check_branch
          %354 = sbr.rel (%p352) target = $region44
        $region43: #{tpu_custom_call.1} parent=31 // pred_region
          %v355 = vld [vmem:[#allocation2] sm:$0xff]
          %v356 = vld [vmem:[#allocation2 + $0x8] sm:$0xff]
          %v357 = vld [vmem:[#allocation2 + $0x10] sm:$0xff]
          %v358 = vld [vmem:[#allocation2 + $0x18] sm:$0xff]
          %v359 = vmul.f32 %v355, 0.0009765625
          %v360 = vmul.f32 %v356, 0.0009765625
          %v361 = vmul.f32 %v357, 0.0009765625
          %v362 = vmul.f32 %v358, 0.0009765625
          %v363 = vld [vmem:[#allocation3] sm:$0xff]
          %v364 = vld [vmem:[#allocation3 + $0x8] sm:$0xff]
          %v365 = vld [vmem:[#allocation3 + $0x10] sm:$0xff]
          %v366 = vld [vmem:[#allocation3 + $0x18] sm:$0xff]
          %v367 = vlaneseq
          %v368 = vand.u32 %v367, 127
          %vm369 = vcmp.eq.s32.totalorder %v368, 0
          %371 = vset.pattern.permute.xlu0 0
          %372 = vperm.xlu0 %371, %v359
          %v373 = vpop.permute.xlu0 %372
          %376 = vset.pattern.permute.xlu0 0
          %377 = vperm.xlu0 %376, %v360
          %v378 = vpop.permute.xlu0 %377
          %381 = vset.pattern.permute.xlu0 0
          %382 = vperm.xlu0 %381, %v361
          %v383 = vpop.permute.xlu0 %382
          %386 = vset.pattern.permute.xlu0 0
          %387 = vperm.xlu0 %386, %v362
          %v388 = vpop.permute.xlu0 %387
          %391 = vset.pattern.permute.xlu0 0
          %392 = vperm.xlu0 %391, %v363
          %v393 = vpop.permute.xlu0 %392
          %396 = vset.pattern.permute.xlu0 0
          %397 = vperm.xlu0 %396, %v364
          %v398 = vpop.permute.xlu0 %397
          %401 = vset.pattern.permute.xlu0 0
          %402 = vperm.xlu0 %401, %v365
          %v403 = vpop.permute.xlu0 %402
          %406 = vset.pattern.permute.xlu0 0
          %407 = vperm.xlu0 %406, %v366
          %v408 = vpop.permute.xlu0 %407
          %v410 = vsel %vm369, %v373, %v393
          %v411 = vsel %vm369, %v378, %v398
          %v412 = vsel %vm369, %v383, %v403
          %v413 = vsel %vm369, %v388, %v408
          %v414 = vld [vmem:[%s1] sm:$0x3]
          %vm415 = vcmask 261120
          %v417 = vsel %vm415, %v414, 0
          %419 = vmatpush.msra.mxu0 0.0
          %420 = vmatpush.msra.mxu0 0.0
          %421 = vmatpush.msra.mxu0 0.0
          %422 = vmatpush.msra.mxu0 0.0
          %423 = vmatpush.msra.mxu0 0.0
          %424 = vmatpush.msra.mxu0 0.0
          %425 = vmatpush.msra.mxu0 0.0
          %426 = vmatpush.msra.mxu0 0.0
          %427 = vmatpush.msra.mxu0 0.0
          %428 = vmatpush.msra.mxu0 0.0
          %429 = vmatpush.msra.mxu0 0.0
          %430 = vmatpush.msra.mxu0 0.0
          %431 = vmatpush.msra.mxu0 %v413
          %432 = vmatpush.msra.mxu0 %v412
          %433 = vmatpush.msra.mxu0 %v411
          %434 = vmatpush.msra.mxu0 %v410
          %435 = vmatmul.f32.gmra.mxu0 %v417
          %v436 = vpop.f32.mrf.mxu0
          %v437 = vadd.f32 0.0, %v436
          %438 = vdwg.mxu0
          %v439 = vmax.f32 %v437, 0.0
          %v440 = vld [vmem:[%s2] sm:$0xff]
          %v441 = vld [vmem:[%s2 + $0x8] sm:$0xff]
          %v442 = vld [vmem:[%s2 + $0x10] sm:$0xff]
          %v443 = vld [vmem:[%s2 + $0x18] sm:$0xff]
          %vm444 = vcmask 15360
          %v446 = vsel %vm444, %v440, 0
          %v449 = vsel %vm444, %v441, 0
          %v452 = vsel %vm444, %v442, 0
          %v455 = vsel %vm444, %v443, 0
          %vm457 = vcmask 1041408
          %v459 = vsel %vm457, %v439, 0
          %461 = vmatpush.msra.mxu0 0.0
          %462 = vmatpush.msra.mxu0 0.0
          %463 = vmatpush.msra.mxu0 0.0
          %464 = vmatpush.msra.mxu0 0.0
          %465 = vmatpush.msra.mxu0 0.0
          %466 = vmatpush.msra.mxu0 0.0
          %467 = vmatpush.msra.mxu0 0.0
          %468 = vmatpush.msra.mxu0 0.0
          %469 = vmatpush.msra.mxu0 0.0
          %470 = vmatpush.msra.mxu0 0.0
          %471 = vmatpush.msra.mxu0 0.0
          %472 = vmatpush.msra.mxu0 0.0
          %473 = vmatpush.msra.mxu0 0.0
          %474 = vmatpush.msra.mxu0 0.0
          %475 = vmatpush.msra.mxu0 0.0
          %476 = vmatpush.msra.mxu0 %v459
          %477 = vmatmul.f32.gmra.mxu0 %v446
          %v478 = vpop.f32.mrf.mxu0
          %v479 = vadd.f32 0.0, %v478
          %480 = vmatmul.f32.gmra.mxu0 %v449
          %v481 = vpop.f32.mrf.mxu0
          %v482 = vadd.f32 0.0, %v481
          %483 = vmatmul.f32.gmra.mxu0 %v452
          %v484 = vpop.f32.mrf.mxu0
          %v485 = vadd.f32 0.0, %v484
          %486 = vmatmul.f32.gmra.mxu0 %v455
          %v487 = vpop.f32.mrf.mxu0
          %v488 = vadd.f32 0.0, %v487
          %489 = vdwg.mxu0
          %v490 = vsel %vm444, %v479, 0.0
          %491 = vadd.xlane.f32.xlu0 %v490
          %v492 = vpop.xlane.xlu0 %491
          %v493 = vsel %vm444, %v482, 0.0
          %494 = vadd.xlane.f32.xlu0 %v493
          %v495 = vpop.xlane.xlu0 %494
          %v496 = vsel %vm444, %v485, 0.0
          %497 = vadd.xlane.f32.xlu0 %v496
          %v498 = vpop.xlane.xlu0 %497
          %v499 = vsel %vm444, %v488, 0.0
          %500 = vadd.xlane.f32.xlu0 %v499
          %v501 = vpop.xlane.xlu0 %500
          %v502 = vxor.u32 %v492, 2147483648
          %v503 = vxor.u32 %v495, 2147483648
          %v504 = vxor.u32 %v498, 2147483648
          %v505 = vxor.u32 %v501, 2147483648
          %v506 = vmul.f32 %v502, 1.442695
          %v507 = vpow.pop %v506
          %v508 = vmul.f32 %v503, 1.442695
          %v509 = vpow.pop %v508
          %v510 = vmul.f32 %v504, 1.442695
          %v511 = vpow.pop %v510
          %v512 = vmul.f32 %v505, 1.442695
          %v513 = vpow.pop %v512
          %v514 = vadd.f32 %v507, 1.0
          %v515 = vadd.f32 %v509, 1.0
          %v516 = vadd.f32 %v511, 1.0
          %v517 = vadd.f32 %v513, 1.0
          %v518 = vrcp.pop %v514
          %v519 = vmul.f32 %v514, %v518
          %v520 = vsub.f32 1.0, %v519
          %v521 = vmul.f32 %v518, %v520
          %v522 = vadd.f32 %v518, %v521
          %vm523 = vweird.f32 %v514
          %vm524 = vweird.f32 %v518
          %vm525 = vmor %vm523, %vm524
          %v526 = vsel %vm525, %v518, %v522
          %v527 = vand.u32 2147483647, %v514
          %vm528 = vcmp.eq.f32.partialorder %v527, 8.507059e+37
          %v529 = vand.u32 %v514, 2147483648
          %v530 = vor.u32 1.1754944e-38, %v529
          %v531 = vsel %vm528, %v530, %v526
          %v532 = vmul.f32 1.0, %v531
          %v533 = vrcp.pop %v515
          %v534 = vmul.f32 %v515, %v533
          %v535 = vsub.f32 1.0, %v534
          %v536 = vmul.f32 %v533, %v535
          %v537 = vadd.f32 %v533, %v536
          %vm538 = vweird.f32 %v515
          %vm539 = vweird.f32 %v533
          %vm540 = vmor %vm538, %vm539
          %v541 = vsel %vm540, %v533, %v537
          %v542 = vand.u32 2147483647, %v515
          %vm543 = vcmp.eq.f32.partialorder %v542, 8.507059e+37
          %v544 = vand.u32 %v515, 2147483648
          %v545 = vor.u32 1.1754944e-38, %v544
          %v546 = vsel %vm543, %v545, %v541
          %v547 = vmul.f32 1.0, %v546
          %v548 = vrcp.pop %v516
          %v549 = vmul.f32 %v516, %v548
          %v550 = vsub.f32 1.0, %v549
          %v551 = vmul.f32 %v548, %v550
          %v552 = vadd.f32 %v548, %v551
          %vm553 = vweird.f32 %v516
          %vm554 = vweird.f32 %v548
          %vm555 = vmor %vm553, %vm554
          %v556 = vsel %vm555, %v548, %v552
          %v557 = vand.u32 2147483647, %v516
          %vm558 = vcmp.eq.f32.partialorder %v557, 8.507059e+37
          %v559 = vand.u32 %v516, 2147483648
          %v560 = vor.u32 1.1754944e-38, %v559
          %v561 = vsel %vm558, %v560, %v556
          %v562 = vmul.f32 1.0, %v561
          %v563 = vrcp.pop %v517
          %v564 = vmul.f32 %v517, %v563
          %v565 = vsub.f32 1.0, %v564
          %v566 = vmul.f32 %v563, %v565
          %v567 = vadd.f32 %v563, %v566
          %vm568 = vweird.f32 %v517
          %vm569 = vweird.f32 %v563
          %vm570 = vmor %vm568, %vm569
          %v571 = vsel %vm570, %v563, %v567
          %v572 = vand.u32 2147483647, %v517
          %vm573 = vcmp.eq.f32.partialorder %v572, 8.507059e+37
          %v574 = vand.u32 %v517, 2147483648
          %v575 = vor.u32 1.1754944e-38, %v574
          %v576 = vsel %vm573, %v575, %v571
          %v577 = vmul.f32 1.0, %v576
          %578 = vst.msk [vmem:[%s209] sm:$0xff] %vm299, %v532
          %579 = vst.msk [vmem:[%s209 + $0x8] sm:$0xff] %vm299, %v547
          %580 = vst.msk [vmem:[%s209 + $0x10] sm:$0xff] %vm299, %v562
          %581 = vst.msk [vmem:[%s209 + $0x18] sm:$0xff] %vm299, %v577
        $region44: #{tpu_custom_call.1} parent=31 // pred_fallthru
          _
        %p582 = scmp.lt.s32.totalorder %s21, 1
        %s583 = scalar_select %p582, %s21, 1
        %s584 = smul.addr %s583, 4
        %s585 = smul.addr %s584, 8
        %s586 = scalar_lea.vmem %s3, %s585
        // Predicated region
        $region45: #{tpu_custom_call.1} parent=31 // pred_check
          %p587 = pneg %p117
        $region46: #{tpu_custom_call.1} parent=31 // pred_check_branch
          %589 = sbr.rel (%p587) target = $region48
        $region47: #{tpu_custom_call.1} parent=31 // pred_region
          _
        $region48: #{tpu_custom_call.1} parent=31 // pred_fallthru
          _
      $region32: #{tpu_custom_call.1} parent=5 // pred_fallthru
        _
      %p590 = scmp.le.s32.totalorder 2, %s12
      // Predicated region
      $region49: #{tpu_custom_call.1} parent=5 // pred_check
        %p591 = pneg %p590
      $region50: #{tpu_custom_call.1} parent=5 // pred_check_branch
        %593 = sbr.rel (%p591) target = $region52
      $region51: #{tpu_custom_call.1} parent=5 // pred_region
        %s594 = ssub.s32 %s12, 2
        // Predicated region
        $region53: #{tpu_custom_call.1} parent=51 // pred_check
          %p595 = pneg %p123
        $region54: #{tpu_custom_call.1} parent=51 // pred_check_branch
          %597 = sbr.rel (%p595) target = $region56
        $region55: #{tpu_custom_call.1} parent=51 // pred_region
          %p598 = scmp.lt.s32.totalorder %s23, 1
          %s599 = scalar_select %p598, %s23, 1
          %s600 = smul.addr %s599, 4
          %s601 = smul.addr %s600, 8
          %s602 = scalar_lea.vmem %s3, %s601
        $region56: #{tpu_custom_call.1} parent=51 // pred_fallthru
          _
      $region52: #{tpu_custom_call.1} parent=5 // pred_fallthru
        _
    $region6: #{tpu_custom_call.1} parent=1 // loop_footer
      %s16 = sadd.s32 1, %s12
    $region7: #{tpu_custom_call.1} parent=1 // loop_footer_branch
      %11 = sbr.rel target = $region3
    $region8: #{tpu_custom_call.1} parent=1 // loop_exit
      _
    %603 = vsyncpa [#allocation5], 1
    %s604 = scalar_lea.sflag [#allocation5], 1
    %605 = vsyncpa %s604, 1

</llo_original>
